<compile_context>
chip_gen: v7x
topology: tpu7x:2x2x1
jax: 0.10.0
libtpu: 0.0.40
codegen_flags: <defaults>
</compile_context>

<pallas_src>
import functools

import jax
import jax.numpy as jnp
from jax import lax
from jax.experimental import pallas as pl
from jax.experimental.pallas import tpu as pltpu


def _round_up(x, m):
    return ((x + m - 1) // m) * m


# ----------------------------------------------------------------------------
# Linear projection kernel:  y = x @ W^T + b   (matches torch.nn.Linear)
# ----------------------------------------------------------------------------
def _linear_kernel(x_ref, w_ref, b_ref, o_ref):
    x = x_ref[...].astype(jnp.bfloat16)
    w = w_ref[...].astype(jnp.bfloat16)
    # contraction on the last dim of both operands -> no weight transpose needed
    y = lax.dot_general(x, w, dimension_numbers=(((1,), (1,)), ((), ())),
                        preferred_element_type=jnp.float32)
    o_ref[...] = (y + b_ref[...]).astype(o_ref.dtype)


def pallas_linear(x, w, b, *, block_rows=512):
    # x: (N, d_in), w: (d_out, d_in), b: (d_out,) -> (N, d_out)
    n, d_in = x.shape
    d_out = w.shape[0]
    tm = min(block_rows, _round_up(n, 8))
    n_pad = _round_up(n, tm)
    if n_pad != n:
        x = jnp.pad(x, ((0, n_pad - n), (0, 0)))
    out = pl.pallas_call(
        _linear_kernel,
        out_shape=jax.ShapeDtypeStruct((n_pad, d_out), x.dtype),
        grid=(n_pad // tm,),
        in_specs=[
            pl.BlockSpec((tm, d_in), lambda i: (i, 0)),
            pl.BlockSpec((d_out, d_in), lambda i: (0, 0)),   # constant block -> fetched once
            pl.BlockSpec((1, d_out), lambda i: (0, 0)),
        ],
        out_specs=pl.BlockSpec((tm, d_out), lambda i: (i, 0)),
        compiler_params=pltpu.CompilerParams(
            dimension_semantics=("parallel",)),
    )(x, w, b.reshape(1, d_out))
    return out[:n] if n_pad != n else out


# ----------------------------------------------------------------------------
# AKT monotonic-attention + fused output-projection kernel.
# One (batch, query-tile) per grid point; all heads processed inside the kernel;
# lane-dense (TQ, d_model) output that is already the out_proj result.
# ----------------------------------------------------------------------------
def _akt_attn_kernel(q_ref, k_ref, v_ref, mask_ref, pos_ref, tri_ref, gamma_ref,
                     ow_ref, ob_ref, o_ref, *, n_heads, d_k, zero_pad):
    TQ = q_ref.shape[0]
    S = k_ref.shape[0]
    qi = pl.program_id(1)

    mask = mask_ref[...]          # (TQ, S) f32, 1.0 = attend
    pos = pos_ref[...]            # (TQ, S) f32, |key_idx - query_idx|
    tri = tri_ref[...]            # (S, S)  f32, tri[a, b] = 1 iff a <= b
    is_masked = mask == 0.0
    neg_big = jnp.float32(-1e20)
    inv_sqrt_dk = jnp.float32(1.0 / (d_k ** 0.5))
    if zero_pad:
        # global query-row index of each local row; row 0 of the sequence gets zeroed probs
        is_row0 = (qi * TQ + lax.broadcasted_iota(jnp.int32, (TQ, S), 0)) == 0

    head_outs = []
    for h in range(n_heads):      # static unroll -> static lane slices, no dynamic indexing
        cs = slice(h * d_k, (h + 1) * d_k)
        q_bf = q_ref[:, cs].astype(jnp.bfloat16)     # (TQ, d_k)
        k_bf = k_ref[:, cs].astype(jnp.bfloat16)     # (S,  d_k)
        v_bf = v_ref[:, cs].astype(jnp.bfloat16)     # (S,  d_k)

        # scaled attention logits: q @ k^T (bf16 in, f32 accumulation on the MXU)
        scores = lax.dot_general(
            q_bf, k_bf, dimension_numbers=(((1,), (1,)), ((), ())),
            preferred_element_type=jnp.float32) * inv_sqrt_dk          # (TQ, S)

        # ---- distance / forgetting effect (torch.no_grad block), all f32 ----
        m0 = jnp.max(scores, axis=-1, keepdims=True)
        e0 = jnp.exp(scores - m0)
        p0 = e0 * pl.reciprocal(jnp.sum(e0, axis=-1, keepdims=True), approx=True)
        scores_ = p0 * mask
        # cumsum along keys via matmul with an upper-triangular ones matrix (MXU, f32)
        distcum = jnp.dot(scores_, tri, preferred_element_type=jnp.float32)
        disttotal = jnp.sum(scores_, axis=-1, keepdims=True)
        dist = jnp.sqrt(jnp.maximum((disttotal - distcum) * pos, 0.0))

        gamma = gamma_ref[0, h]                      # scalar, = -softplus(gammas[h]) <= 0
        total_effect = jnp.clip(jnp.exp(dist * gamma), 1e-5, 1e5)

        logits = jnp.where(is_masked, neg_big, scores * total_effect)
        m1 = jnp.max(logits, axis=-1, keepdims=True)
        e1 = jnp.exp(logits - m1)
        p = e1 * pl.reciprocal(jnp.sum(e1, axis=-1, keepdims=True), approx=True)

        if zero_pad:
            p = jnp.where(is_row0, 0.0, p)

        # dropout: identity (eval mode)
        head_outs.append(jnp.dot(p.astype(jnp.bfloat16), v_bf,
                                 preferred_element_type=jnp.float32))  # (TQ, d_k)

    # concat heads -> (TQ, d_model), then fused output projection (bf16 MXU, f32 acc)
    concat = jnp.concatenate(head_outs, axis=-1)
    y = lax.dot_general(concat.astype(jnp.bfloat16),
                        ow_ref[...].astype(jnp.bfloat16),
                        dimension_numbers=(((1,), (1,)), ((), ())),
                        preferred_element_type=jnp.float32)
    o_ref[...] = (y + ob_ref[...]).astype(o_ref.dtype)


def pallas_akt_attention(q_p, k_p, v_p, mask2d, pos2d, tri, gamma_neg, out_w, out_b,
                         *, n_heads, d_k, zero_pad, q_block=128):
    # q_p/k_p/v_p: (bs, S, d_model); mask2d/pos2d/tri: (S, S) f32; gamma_neg: (1, h) f32
    # out_w: (d_model, d_model); out_b: (d_model,)
    bs, S, d_model = q_p.shape
    TQ = q_block if (S >= q_block and S % q_block == 0) else S
    grid = (bs, S // TQ)

    kernel = functools.partial(_akt_attn_kernel,
                               n_heads=n_heads, d_k=d_k, zero_pad=zero_pad)

    flops = int(bs * (n_heads * (4 * S * S * d_k + 2 * S * S * S)
                      + 2 * S * d_model * d_model))
    transcendentals = int(4 * bs * n_heads * S * S)          # 3 exp + 1 sqrt per score elem
    bytes_accessed = int(4 * (4 * bs * S * d_model + 3 * S * S
                              + d_model * d_model + d_model + n_heads))

    return pl.pallas_call(
        kernel,
        out_shape=jax.ShapeDtypeStruct((bs, S, d_model), q_p.dtype),
        grid=grid,
        in_specs=[
            pl.BlockSpec((None, TQ, d_model), lambda b, qi: (b, qi, 0)),  # query rows
            pl.BlockSpec((None, S, d_model), lambda b, qi: (b, 0, 0)),    # all keys
            pl.BlockSpec((None, S, d_model), lambda b, qi: (b, 0, 0)),    # all values
            pl.BlockSpec((TQ, S), lambda b, qi: (qi, 0)),                 # mask rows
            pl.BlockSpec((TQ, S), lambda b, qi: (qi, 0)),                 # |key - query| rows
            pl.BlockSpec((S, S), lambda b, qi: (0, 0)),                   # upper-tri ones (const)
            pl.BlockSpec((1, n_heads), lambda b, qi: (0, 0)),             # -softplus(gammas)
            pl.BlockSpec((d_model, d_model), lambda b, qi: (0, 0)),       # out_proj weight (const)
            pl.BlockSpec((1, d_model), lambda b, qi: (0, 0)),             # out_proj bias (const)
        ],
        out_specs=pl.BlockSpec((None, TQ, d_model), lambda b, qi: (b, qi, 0)),
        compiler_params=pltpu.CompilerParams(
            dimension_semantics=("parallel", "parallel"),
            vmem_limit_bytes=32 * 1024 * 1024),
        cost_estimate=pl.CostEstimate(flops=flops,
                                      transcendentals=transcendentals,
                                      bytes_accessed=bytes_accessed),
    )(q_p, k_p, v_p, mask2d, pos2d, tri, gamma_neg, out_w, out_b.reshape(1, d_model))


# ----------------------------------------------------------------------------
# Full MultiHeadAttention forward (glue in JAX, hot paths in Pallas)
# ----------------------------------------------------------------------------
def multi_head_attention(params, q, k, v, mask, *, n_heads, d_k, kq_same, zero_pad,
                         q_block=128):
    bs, S, d_model = q.shape
    q_w = params["k_w"] if kq_same else params["q_w"]
    q_b = params["k_b"] if kq_same else params["q_b"]

    if (q is k) and (k is v):
        # Fused QKV projection: one kernel launch, input DMA'd from HBM once.
        w_qkv = jnp.concatenate([q_w, params["k_w"], params["v_w"]], axis=0)
        b_qkv = jnp.concatenate([q_b, params["k_b"], params["v_b"]], axis=0)
        qkv = pallas_linear(q.reshape(bs * S, d_model), w_qkv, b_qkv)
        q_p = qkv[:, :d_model]
        k_p = qkv[:, d_model:2 * d_model]
        v_p = qkv[:, 2 * d_model:]
    else:
        q_p = pallas_linear(q.reshape(bs * S, d_model), q_w, q_b)
        k_p = pallas_linear(k.reshape(bs * S, d_model), params["k_w"], params["k_b"])
        v_p = pallas_linear(v.reshape(bs * S, d_model), params["v_w"], params["v_b"])

    # Heads stay as contiguous d_k-wide column groups of the d_model axis; no
    # (bs, h, S, d_k) transpose is ever materialised in HBM.
    q_p = q_p.reshape(bs, S, d_model)
    k_p = k_p.reshape(bs, S, d_model)
    v_p = v_p.reshape(bs, S, d_model)

    # Constant tensors hoisted out of the kernel (fetched once per grid walk).
    idx = jnp.arange(S, dtype=jnp.int32)
    pos2d = jnp.abs(idx[None, :] - idx[:, None]).astype(jnp.float32)   # |key - query|
    tri = (idx[:, None] <= idx[None, :]).astype(jnp.float32)           # tri[a,b]=1 iff a<=b
    mask2d = jnp.asarray(mask, jnp.float32).reshape(S, S)              # (1,1,S,S) -> (S,S)

    gamma_neg = (-jax.nn.softplus(params["gammas"])).reshape(1, n_heads).astype(jnp.float32)

    # Attention + out_proj fused into a single launch; the (bs, S, d_model) attention
    # activations never touch HBM.
    out = pallas_akt_attention(q_p, k_p, v_p, mask2d, pos2d, tri, gamma_neg,
                               params["out_w"], params["out_b"],
                               n_heads=n_heads, d_k=d_k, zero_pad=zero_pad,
                               q_block=q_block)
    return out


# ----------------------------------------------------------------------------
# Pure-JAX reference (mirrors the PyTorch forward) for a correctness check
# ----------------------------------------------------------------------------
def reference_forward(params, q, k, v, mask, *, n_heads, d_k, kq_same, zero_pad):
    bs, S, d_model = q.shape

    def lin(x, w, b):
        return x @ w.T + b

    k_p = lin(k, params["k_w"], params["k_b"])
    q_p = lin(q, params["q_w"], params["q_b"]) if not kq_same else lin(q, params["k_w"], params["k_b"])
    v_p = lin(v, params["v_w"], params["v_b"])

    def split_heads(x):
        return x.reshape(bs, S, n_heads, d_k).transpose(0, 2, 1, 3)

    q4, k4, v4 = split_heads(q_p), split_heads(k_p), split_heads(v_p)

    scores = jnp.einsum("bhqd,bhkd->bhqk", q4, k4) / (d_k ** 0.5)
    scores_ = jax.nn.softmax(scores, axis=-1) * mask
    distcum = jnp.cumsum(scores_, axis=-1)
    disttotal = jnp.sum(scores_, axis=-1, keepdims=True)
    x1 = jnp.arange(S)[None, :]
    x2 = jnp.arange(S)[:, None]
    position_effect = jnp.abs(x1 - x2)[None, None].astype(jnp.float32)
    dist_scores = jnp.sqrt(jnp.maximum((disttotal - distcum) * position_effect, 0.0))
    gamma = (-jax.nn.softplus(params["gammas"]))[None]  # (1, h, 1, 1)
    total_effect = jnp.clip(jnp.exp(dist_scores * gamma), 1e-5, 1e5)
    scores = scores * total_effect
    scores = jnp.where(mask == 0, -1e20, scores)
    scores = jax.nn.softmax(scores, axis=-1)
    if zero_pad:
        scores = scores.at[:, :, 0, :].set(0.0)
    out4 = jnp.einsum("bhqk,bhkd->bhqd", scores, v4)
    concat = out4.transpose(0, 2, 1, 3).reshape(bs, S, d_model)
    return lin(concat, params["out_w"], params["out_b"])


if __name__ == "__main__":
    bs, S, d_model, n_heads = 2, 8, 32, 4
    d_k = d_model // n_heads

    key = jax.random.PRNGKey(0)
    ks = jax.random.split(key, 14)

    def xavier(kk, shape):
        bound = (6.0 / (shape[0] + shape[1])) ** 0.5
        return jax.random.uniform(kk, shape, jnp.float32, -bound, bound)

    params = {
        "k_w": xavier(ks[0], (d_model, d_model)),
        "k_b": jax.random.uniform(ks[1], (d_model,), jnp.float32, -0.1, 0.1),
        "q_w": xavier(ks[2], (d_model, d_model)),
        "q_b": jax.random.uniform(ks[3], (d_model,), jnp.float32, -0.1, 0.1),
        "v_w": xavier(ks[4], (d_model, d_model)),
        "v_b": jax.random.uniform(ks[5], (d_model,), jnp.float32, -0.1, 0.1),
        "out_w": xavier(ks[6], (d_model, d_model)),
        "out_b": jax.random.uniform(ks[7], (d_model,), jnp.float32, -0.1, 0.1),
        # gammas ~ xavier_uniform on (n_heads, 1, 1): bound = sqrt(6/2) = sqrt(3)
        "gammas": jax.random.uniform(ks[8], (n_heads, 1, 1), jnp.float32,
                                     -(3.0 ** 0.5), 3.0 ** 0.5),
    }

    # causal (no-peek) mask, as used by AKT: (1, 1, S, S), 1 = attend
    mask = jnp.tril(jnp.ones((S, S), jnp.float32))[None, None]

    # Case 1: self-attention (q = k = v) -> exercises the fused QKV projection path.
    x = jax.random.normal(ks[9], (bs, S, d_model), jnp.float32)
    out1 = jax.block_until_ready(
        multi_head_attention(params, x, x, x, mask,
                             n_heads=n_heads, d_k=d_k, kq_same=False, zero_pad=True))
    ref1 = reference_forward(params, x, x, x, mask,
                             n_heads=n_heads, d_k=d_k, kq_same=False, zero_pad=True)

    # Case 2: distinct q/k/v, kq_same=True, zero_pad=False -> separate projection path.
    q_in = jax.random.normal(ks[10], (bs, S, d_model), jnp.float32)
    k_in = jax.random.normal(ks[11], (bs, S, d_model), jnp.float32)
    v_in = jax.random.normal(ks[12], (bs, S, d_model), jnp.float32)
    out2 = jax.block_until_ready(
        multi_head_attention(params, q_in, k_in, v_in, mask,
                             n_heads=n_heads, d_k=d_k, kq_same=True, zero_pad=False))
    ref2 = reference_forward(params, q_in, k_in, v_in, mask,
                             n_heads=n_heads, d_k=d_k, kq_same=True, zero_pad=False)

    assert out1.shape == (bs, S, d_model) and out2.shape == (bs, S, d_model)
    # bf16 MXU operands (with f32 accumulation) + approx reciprocal -> slightly looser
    # tolerance than a pure-f32 comparison.
    assert bool(jnp.allclose(out1, ref1, atol=1e-1, rtol=1e-1)), "mismatch (self-attn case)"
    assert bool(jnp.allclose(out2, ref2, atol=1e-1, rtol=1e-1)), "mismatch (cross-attn case)"

    print("KERNEL_OK")
</pallas_src>

<mosaic_0001>
module attributes {stable_mosaic.version = 11 : i64} {
  func.func @_linear_kernel(%arg0: i32, %arg1: memref<16x32xf32, #tpu.memory_space<vmem>>, %arg2: memref<96x32xf32, #tpu.memory_space<vmem>>, %arg3: memref<1x96xf32, #tpu.memory_space<vmem>>, %arg4: memref<16x96xf32, #tpu.memory_space<vmem>>) attributes {dimension_semantics = [#tpu.dimension_semantics<parallel>], iteration_bounds = array<i64: 1>, scalar_prefetch = 0 : i64, scratch_operands = 0 : i64, tpu.core_type = #tpu.core_type<tc>, window_params = [{transform_indices = @transform_0, window_bounds = array<i64: 16, 32>}, {pipeline_mode = #tpu.pipeline_mode<synchronous>, transform_indices = @transform_1, window_bounds = array<i64: 96, 32>}, {pipeline_mode = #tpu.pipeline_mode<synchronous>, transform_indices = @transform_2, window_bounds = array<i64: 1, 96>}, {transform_indices = @transform_3, window_bounds = array<i64: 16, 96>}]} {
    %c0 = arith.constant 0 : index
    %c0_0 = arith.constant 0 : index
    %0 = vector.load %arg1[%c0, %c0_0] : memref<16x32xf32, #tpu.memory_space<vmem>>, vector<16x32xf32>
    %1 = arith.truncf %0 : vector<16x32xf32> to vector<16x32xbf16>
    %c0_1 = arith.constant 0 : index
    %c0_2 = arith.constant 0 : index
    %2 = vector.load %arg2[%c0_1, %c0_2] : memref<96x32xf32, #tpu.memory_space<vmem>>, vector<96x32xf32>
    %3 = arith.truncf %2 : vector<96x32xf32> to vector<96x32xbf16>
    %cst = arith.constant dense<0.000000e+00> : vector<16x96xf32>
    %4 = tpu.matmul %1, %3, %cst {dimension_numbers = #tpu.dot_dimension_numbers<[1], [1], [0], [0], [0, 0, 1, 0], [], []>} : vector<16x32xbf16>, vector<96x32xbf16>, vector<16x96xf32> -> vector<16x96xf32>
    %c0_3 = arith.constant 0 : index
    %c0_4 = arith.constant 0 : index
    %5 = vector.load %arg3[%c0_3, %c0_4] : memref<1x96xf32, #tpu.memory_space<vmem>>, vector<1x96xf32>
    %6 = vector.broadcast %5 : vector<1x96xf32> to vector<16x96xf32>
    %7 = arith.addf %4, %6 : vector<16x96xf32>
    %c0_5 = arith.constant 0 : index
    %c0_6 = arith.constant 0 : index
    %8 = vector.load %arg4[%c0_5, %c0_6] : memref<16x96xf32, #tpu.memory_space<vmem>>, vector<16x96xf32>
    tpu.vector_store %arg4[%c0_5, %c0_6], %7 {strides = array<i32>} : memref<16x96xf32, #tpu.memory_space<vmem>>, vector<16x96xf32>,
    return
  }
  func.func @transform_0(%arg0: i32) -> (i32, i32) {
    %c0_i32 = arith.constant 0 : i32
    %c0_i32_0 = arith.constant 0 : i32
    return %arg0, %c0_i32 : i32, i32
  }
  func.func @transform_1(%arg0: i32) -> (i32, i32) {
    %c0_i32 = arith.constant 0 : i32
    %c0_i32_0 = arith.constant 0 : i32
    %c0_i32_1 = arith.constant 0 : i32
    return %c0_i32, %c0_i32_0 : i32, i32
  }
  func.func @transform_2(%arg0: i32) -> (i32, i32) {
    %c0_i32 = arith.constant 0 : i32
    %c0_i32_0 = arith.constant 0 : i32
    %c0_i32_1 = arith.constant 0 : i32
    return %c0_i32, %c0_i32_0 : i32, i32
  }
  func.func @transform_3(%arg0: i32) -> (i32, i32) {
    %c0_i32 = arith.constant 0 : i32
    %c0_i32_0 = arith.constant 0 : i32
    return %arg0, %c0_i32 : i32, i32
  }
}

</mosaic_0001>

<llo_original>
// kernel: tpu_custom_call.1
$region0: #{tpu_custom_call.1}
  #allocation0 [shape = 'u32[]', space=smem, size = 0x4, offset = 0x4, fixed_abs, tag = 'smem constant byte address 0x4 - core index']
  #allocation1 [shape = 'u32[144,128]{1,0:T(1,128)}', space=vmem, size = 0x12000, scoped, tag = 'internal scratch']
  %s0 = inlined_call_operand.vmem [shape: f32[16,32], index: 0, kind: input, shape index: {}]
  %s1 = inlined_call_operand.vmem [shape: f32[96,32], index: 1, kind: input, shape index: {}]
  %s2 = inlined_call_operand.vmem [shape: f32[1,96], index: 2, kind: input, shape index: {}]
  %s3 = inlined_call_operand.hbm [shape: f32[16,96], index: 3, kind: output, shape index: {}]
  %s4 = sld [smem:[#allocation0]]
  $region22: #{tpu_custom_call.1} parent=0
    _
  %s6 = ssub.s32 1, %s4
  %s7 = scalar_select 0, %s6, %s4
  $region1: #{tpu_custom_call.1} parent=0
    #allocation2 [shape = 'u8[8192]{0}', space=vmem, size = 0x2000, scoped, tag = 'output window, operand 0, single buffered']
    #allocation3 [shape = 's32[1]{0}', space=sflag, size = 0x4, scoped, tag = 'scoped memory for tpu_custom_call.1']
    %8 = vsyncpa [#allocation3], 0
    // Predicated region
    $region2: #{tpu_custom_call.1} parent=1 // pred_check
      _
    $region3: #{tpu_custom_call.1} parent=1 // pred_check_branch
      %10 = sbr.rel (0) target = $region5
    $region4: #{tpu_custom_call.1} parent=1 // pred_region
      _
    $region5: #{tpu_custom_call.1} parent=1 // pred_fallthru
      _
    // Predicated region
    $region6: #{tpu_custom_call.1} parent=1 // pred_check
      _
    $region7: #{tpu_custom_call.1} parent=1 // pred_check_branch
      %12 = sbr.rel (0) target = $region9
    $region8: #{tpu_custom_call.1} parent=1 // pred_region
      _
    $region9: #{tpu_custom_call.1} parent=1 // pred_fallthru
      _
    // Predicated region
    $region10: #{tpu_custom_call.1} parent=1 // pred_check
      _
    $region11: #{tpu_custom_call.1} parent=1 // pred_check_branch
      %14 = sbr.rel (0) target = $region13
    $region12: #{tpu_custom_call.1} parent=1 // pred_region
      _
    $region13: #{tpu_custom_call.1} parent=1 // pred_fallthru
      _
    %v16 = vld [vmem:[%s0] sm:$0xff]
    %v17 = vld [vmem:[%s0 + $0x8] sm:$0xff]
    %v18 = vpack.c.bf16 %v17, %v16
    %v19 = vld [vmem:[%s1] sm:$0xff]
    %v20 = vld [vmem:[%s1 + $0x8] sm:$0xff]
    %v21 = vld [vmem:[%s1 + $0x10] sm:$0xff]
    %v22 = vld [vmem:[%s1 + $0x18] sm:$0xff]
    %v23 = vld [vmem:[%s1 + $0x20] sm:$0xff]
    %v24 = vld [vmem:[%s1 + $0x28] sm:$0xff]
    %v25 = vld [vmem:[%s1 + $0x30] sm:$0xff]
    %v26 = vld [vmem:[%s1 + $0x38] sm:$0xff]
    %v27 = vld [vmem:[%s1 + $0x40] sm:$0xff]
    %v28 = vld [vmem:[%s1 + $0x48] sm:$0xff]
    %v29 = vld [vmem:[%s1 + $0x50] sm:$0xff]
    %v30 = vld [vmem:[%s1 + $0x58] sm:$0xff]
    %v31 = vpack.c.bf16 %v20, %v19
    %v32 = vpack.c.bf16 %v22, %v21
    %v33 = vpack.c.bf16 %v24, %v23
    %v34 = vpack.c.bf16 %v26, %v25
    %v35 = vpack.c.bf16 %v28, %v27
    %v36 = vpack.c.bf16 %v30, %v29
    %v37 = vld [vmem:[%s2] sm:$0x1]
    %v39 = vlaneseq
    %v40 = vshrl.u32 %v39, 7
    %v41 = vsub.s32 0, %v40
    %v42 = vrot.slane %v37, %v41
    %vm44 = vcmask 261120
    %v46 = vsel %vm44, %v18, 0
    %v49 = vsel %vm44, %v31, 0
    %v52 = vsel %vm44, %v32, 0
    %v55 = vsel %vm44, %v33, 0
    %v58 = vsel %vm44, %v34, 0
    %v61 = vsel %vm44, %v35, 0
    %v64 = vsel %vm44, %v36, 0
    %66 = vmatprep.subr.bf16.mxu0 0
    %67 = vmatpush1.bf16.xpose.msra.mxu0 %v49
    %68 = vmatprep.subr.bf16.mxu0 0
    %69 = vmatpush1.bf16.xpose.msra.mxu0 %v52
    %70 = vmatprep.subr.bf16.mxu0 0
    %71 = vmatpush1.bf16.xpose.msra.mxu0 %v55
    %72 = vmatprep.subr.bf16.mxu0 0
    %73 = vmatpush1.bf16.xpose.msra.mxu0 %v58
    %74 = vmatprep.subr.bf16.mxu0 0
    %75 = vmatpush1.bf16.xpose.msra.mxu0 %v61
    %76 = vmatprep.subr.bf16.mxu0 0
    %77 = vmatpush1.bf16.xpose.msra.mxu0 %v64
    %78 = vmatprep.subr.bf16.mxu0 0
    %79 = vmatpush1.bf16.xpose.msra.mxu0 0
    %80 = vmatprep.subr.bf16.mxu0 0
    %81 = vmatpush1.bf16.xpose.msra.mxu0 0
    %82 = vmatprep.subr.bf16.mxu0 0
    %83 = vmatpush1.bf16.xpose.msra.mxu0 0
    %84 = vmatprep.subr.bf16.mxu0 0
    %85 = vmatpush1.bf16.xpose.msra.mxu0 0
    %86 = vmatprep.subr.bf16.mxu0 0
    %87 = vmatpush1.bf16.xpose.msra.mxu0 0
    %88 = vmatprep.subr.bf16.mxu0 0
    %89 = vmatpush1.bf16.xpose.msra.mxu0 0
    %90 = vmatprep.subr.bf16.mxu0 0
    %91 = vmatpush1.bf16.xpose.msra.mxu0 0
    %92 = vmatprep.subr.bf16.mxu0 0
    %93 = vmatpush1.bf16.xpose.msra.mxu0 0
    %94 = vmatprep.subr.bf16.mxu0 0
    %95 = vmatpush1.bf16.xpose.msra.mxu0 0
    %96 = vmatprep.subr.bf16.mxu0 0
    %97 = vmatpush1.bf16.xpose.msra.mxu0 0
    %98 = vmatprep.mubr.bf16.mxu0 0
    %99 = vmatmul.mubr.bf16.gmra.mrb[0].mxu0 %v46
    %v100 = vpop.f32.mrb[0].mxu0
    %v101 = vadd.f32 %v42, %v100
    %v102 = vpop.f32.mrb[0].mxu0
    %v103 = vpop.f32.mrb[0].mxu0
    %v104 = vadd.f32 %v42, %v103
    %v105 = vpop.f32.mrb[0].mxu0
    %106 = vdwg.mxu0
    %vm107 = vcmask 785408
    %108 = vst.msk [vmem:[#allocation2] sm:$0xff] %vm107, %v101
    %109 = vst.msk [vmem:[#allocation2 + $0x8] sm:$0xff] %vm107, %v104
    // Predicated region
    $region14: #{tpu_custom_call.1} parent=1 // pred_check
      _
    $region15: #{tpu_custom_call.1} parent=1 // pred_check_branch
      %111 = sbr.rel (0) target = $region17
    $region16: #{tpu_custom_call.1} parent=1 // pred_region
      %s113 = ssub.s32 256, 256
      %114 = vsyncadd [#allocation3], %s113
      %s115 = sshll.u32 [#allocation2], 4
      %s116 = int_to_ptr.vmem [resolvable:$true] %s115
      %121 = dma.vmem_to_hbm [thread:$0]  %s116, 256, %s3, [#allocation3], 128, 128, 8
    $region17: #{tpu_custom_call.1} parent=1 // pred_fallthru
      _
    // Predicated region
    $region18: #{tpu_custom_call.1} parent=1 // pred_check
      _
    $region19: #{tpu_custom_call.1} parent=1 // pred_check_branch
      %123 = sbr.rel (0) target = $region21
    $region20: #{tpu_custom_call.1} parent=1 // pred_region
      %124 = dma.done [#allocation3], 256
    $region21: #{tpu_custom_call.1} parent=1 // pred_fallthru
      _
    %125 = vsyncpa [#allocation3], 1

</llo_original>
